<compile_context>
chip_gen: v7x
topology: tpu7x:2x2x1
jax: 0.10.0
libtpu: 0.0.40
codegen_flags: <defaults>
</compile_context>

<pallas_src>
import functools

import jax
import jax.numpy as jnp
from jax.experimental import pallas as pl
from jax.experimental.pallas import tpu as pltpu


def _round_up(x, m):
    return ((x + m - 1) // m) * m


def _pool_matrix(H, W, out_H, out_W, kh, kw, sh, sw, dtype=jnp.float32):
    """(H*W, out_H*out_W) matrix with 1/(kh*kw) where pixel (h,w) lies in window (oh,ow)."""
    h = jnp.arange(H)
    w = jnp.arange(W)
    oh = jnp.arange(out_H)
    ow = jnp.arange(out_W)
    h_in = (h[:, None] >= oh[None, :] * sh) & (h[:, None] < oh[None, :] * sh + kh)  # (H, out_H)
    w_in = (w[:, None] >= ow[None, :] * sw) & (w[:, None] < ow[None, :] * sw + kw)  # (W, out_W)
    m = h_in[:, None, :, None] & w_in[None, :, None, :]                             # (H, W, oH, oW)
    p = m.astype(dtype) / jnp.asarray(kh * kw, dtype)
    return p.reshape(H * W, out_H * out_W)


def _pool_kernel(x_ref, p_ref, o_ref):
    # x_ref: (tm, H*W) rows of flattened (B*C, H*W) input
    # p_ref: (H*W, out_H*out_W) resident pooling matrix (scale folded in)
    # o_ref: (tm, out_H*out_W)
    o_ref[...] = jnp.dot(
        x_ref[...], p_ref[...], preferred_element_type=jnp.float32
    ).astype(o_ref.dtype)


def _adaptive_pool_one(x, out_H, out_W, *, target_tile_bytes=4 << 20):
    """AdaptiveAvgPool2dCustom((out_H, out_W)) for one NCHW tensor via a Pallas matmul."""
    B, C, H, W = x.shape
    if W < out_W:  # module's zero-pad-width branch
        x = jnp.pad(x, ((0, 0), (0, 0), (0, 0), (0, out_W - W)))
        W = out_W
    sh, sw = H // out_H, W // out_W
    kh, kw = H - (out_H - 1) * sh, W - (out_W - 1) * sw

    HW = H * W
    P_out = out_H * out_W
    pmat = _pool_matrix(H, W, out_H, out_W, kh, kw, sh, sw, dtype=x.dtype)

    M = B * C
    x_flat = x.reshape(M, HW)  # channel-major, no transpose needed

    # Row tile: big (mem-bound kernel), multiple of 8, ~target_tile_bytes per buffer so a
    # double-buffered x tile stays well under the 32 MiB scoped-VMEM default on all gens.
    M_r8 = _round_up(M, 8)
    tm = max(8, min(2048, target_tile_bytes // max(1, HW * x.dtype.itemsize)))
    tm = max(8, (tm // 8) * 8)
    tm = min(tm, M_r8)
    M_pad = _round_up(M, tm)
    if M_pad != M:
        x_flat = jnp.pad(x_flat, ((0, M_pad - M), (0, 0)))

    grid = (M_pad // tm,)
    out_flat = pl.pallas_call(
        _pool_kernel,
        out_shape=jax.ShapeDtypeStruct((M_pad, P_out), x.dtype),
        grid_spec=pltpu.PrefetchScalarGridSpec(
            num_scalar_prefetch=0,
            grid=grid,
            in_specs=[
                pl.BlockSpec((tm, HW), lambda i: (i, 0)),      # streamed x rows
                pl.BlockSpec((HW, P_out), lambda i: (0, 0)),   # resident pooling matrix
            ],
            out_specs=pl.BlockSpec((tm, P_out), lambda i: (i, 0)),
        ),
        compiler_params=pltpu.CompilerParams(
            dimension_semantics=("parallel",)),
    )(x_flat, pmat)

    return out_flat[:M].reshape(B, C, out_H, out_W)


def pyramid_pool_agg(inputs, stride):
    """inputs: list of NCHW arrays (B, C_i, H_i, W_i). Returns (B, sum(C_i), out_H, out_W)."""
    _, _, H, W = inputs[-1].shape
    out_H = (H - 1) // stride + 1
    out_W = (W - 1) // stride + 1
    pooled = [_adaptive_pool_one(x, out_H, out_W) for x in inputs]
    return jnp.concatenate(pooled, axis=1)


# ----------------------------- plain-JAX reference -----------------------------

def _ref_adaptive_pool(x, out_H, out_W):
    B, C, H, W = x.shape
    if W < out_W:
        x = jnp.pad(x, ((0, 0), (0, 0), (0, 0), (0, out_W - W)))
        W = out_W
    sh, sw = H // out_H, W // out_W
    kh, kw = H - (out_H - 1) * sh, W - (out_W - 1) * sw
    rows = []
    for oh in range(out_H):
        cols = []
        for ow in range(out_W):
            win = x[:, :, oh * sh:oh * sh + kh, ow * sw:ow * sw + kw]
            cols.append(jnp.mean(win, axis=(2, 3)))
        rows.append(jnp.stack(cols, axis=-1))
    return jnp.stack(rows, axis=-2)


def reference_forward(inputs, stride):
    _, _, H, W = inputs[-1].shape
    out_H = (H - 1) // stride + 1
    out_W = (W - 1) // stride + 1
    return jnp.concatenate([_ref_adaptive_pool(x, out_H, out_W) for x in inputs], axis=1)


if __name__ == "__main__":
    key = jax.random.PRNGKey(0)
    k1, k2, k3, k4 = jax.random.split(key, 4)

    B = 2
    stride = 2
    # Small topformer-style multi-scale pyramid (last map is the smallest).
    inputs = [
        jax.random.normal(k1, (B, 16, 32, 32), jnp.float32),
        jax.random.normal(k2, (B, 32, 16, 16), jnp.float32),
        jax.random.normal(k3, (B, 64, 8, 8), jnp.float32),
        jax.random.normal(k4, (B, 96, 4, 4), jnp.float32),
    ]

    out = pyramid_pool_agg(inputs, stride)
    out = jax.block_until_ready(out)

    ref = reference_forward(inputs, stride)
    out_H = (inputs[-1].shape[2] - 1) // stride + 1
    out_W = (inputs[-1].shape[3] - 1) // stride + 1
    assert out.shape == (B, 16 + 32 + 64 + 96, out_H, out_W), out.shape
    assert jnp.allclose(out, ref, atol=1e-5, rtol=1e-5), "mismatch vs reference"

    # TODO(synk): the torch.onnx.is_in_onnx_export() branch of get_shape is host-side
    # export plumbing with no runtime math; intentionally not translated.
    print("KERNEL_OK")
</pallas_src>

<mosaic_0001>
module attributes {stable_mosaic.version = 11 : i64} {
  func.func @_pool_kernel(%arg0: i32, %arg1: memref<32x1024xf32, #tpu.memory_space<vmem>>, %arg2: memref<1024x4xf32, #tpu.memory_space<vmem>>, %arg3: memref<32x4xf32, #tpu.memory_space<vmem>>) attributes {dimension_semantics = [#tpu.dimension_semantics<parallel>], iteration_bounds = array<i64: 1>, scalar_prefetch = 0 : i64, scratch_operands = 0 : i64, tpu.core_type = #tpu.core_type<tc>, window_params = [{transform_indices = @transform_0, window_bounds = array<i64: 32, 1024>}, {pipeline_mode = #tpu.pipeline_mode<synchronous>, transform_indices = @transform_1, window_bounds = array<i64: 1024, 4>}, {transform_indices = @transform_2, window_bounds = array<i64: 32, 4>}]} {
    %c0 = arith.constant 0 : index
    %c0_0 = arith.constant 0 : index
    %0 = vector.load %arg1[%c0, %c0_0] : memref<32x1024xf32, #tpu.memory_space<vmem>>, vector<32x1024xf32>
    %c0_1 = arith.constant 0 : index
    %c0_2 = arith.constant 0 : index
    %1 = vector.load %arg2[%c0_1, %c0_2] : memref<1024x4xf32, #tpu.memory_space<vmem>>, vector<1024x4xf32>
    %cst = arith.constant dense<0.000000e+00> : vector<32x4xf32>
    %2 = tpu.matmul %0, %1, %cst {dimension_numbers = #tpu.dot_dimension_numbers<[1], [0], [0], [1], [0, 0, 1, 1], [], []>} : vector<32x1024xf32>, vector<1024x4xf32>, vector<32x4xf32> -> vector<32x4xf32>
    %c0_3 = arith.constant 0 : index
    %c0_4 = arith.constant 0 : index
    %3 = vector.load %arg3[%c0_3, %c0_4] : memref<32x4xf32, #tpu.memory_space<vmem>>, vector<32x4xf32>
    tpu.vector_store %arg3[%c0_3, %c0_4], %2 {strides = array<i32>} : memref<32x4xf32, #tpu.memory_space<vmem>>, vector<32x4xf32>,
    return
  }
  func.func @transform_0(%arg0: i32) -> (i32, i32) {
    %c0_i32 = arith.constant 0 : i32
    %c0_i32_0 = arith.constant 0 : i32
    return %arg0, %c0_i32 : i32, i32
  }
  func.func @transform_1(%arg0: i32) -> (i32, i32) {
    %c0_i32 = arith.constant 0 : i32
    %c0_i32_0 = arith.constant 0 : i32
    %c0_i32_1 = arith.constant 0 : i32
    return %c0_i32, %c0_i32_0 : i32, i32
  }
  func.func @transform_2(%arg0: i32) -> (i32, i32) {
    %c0_i32 = arith.constant 0 : i32
    %c0_i32_0 = arith.constant 0 : i32
    return %arg0, %c0_i32 : i32, i32
  }
}

</mosaic_0001>

<llo_original>
// kernel: tpu_custom_call.1
$region0: #{tpu_custom_call.1}
  #allocation0 [shape = 'u32[]', space=smem, size = 0x4, offset = 0x4, fixed_abs, tag = 'smem constant byte address 0x4 - core index']
  #allocation1 [shape = 'u32[144,128]{1,0:T(1,128)}', space=vmem, size = 0x12000, scoped, tag = 'internal scratch']
  %s0 = inlined_call_operand.vmem [shape: f32[32,1024], index: 0, kind: input, shape index: {}]
  %s1 = inlined_call_operand.vmem [shape: f32[1024,4], index: 1, kind: input, shape index: {}]
  %s2 = inlined_call_operand.vmem [shape: f32[32,4], index: 2, kind: output, shape index: {}]
  %s3 = sld [smem:[#allocation0]]
  $region18: #{tpu_custom_call.1} parent=0
    _
  %s5 = ssub.s32 1, %s3
  %s6 = scalar_select 0, %s5, %s3
  // Predicated region
  $region2: #{tpu_custom_call.1} parent=0 // pred_check
    _
  $region3: #{tpu_custom_call.1} parent=0 // pred_check_branch
    %8 = sbr.rel (0) target = $region5
  $region4: #{tpu_custom_call.1} parent=0 // pred_region
    _
  $region5: #{tpu_custom_call.1} parent=0 // pred_fallthru
    _
  // Predicated region
  $region6: #{tpu_custom_call.1} parent=0 // pred_check
    _
  $region7: #{tpu_custom_call.1} parent=0 // pred_check_branch
    %10 = sbr.rel (0) target = $region9
  $region8: #{tpu_custom_call.1} parent=0 // pred_region
    _
  $region9: #{tpu_custom_call.1} parent=0 // pred_fallthru
    _
  %v11 = vld [vmem:[%s0] sm:$0xff]
  %v12 = vld [vmem:[%s0 + $0x8] sm:$0xff]
  %v13 = vld [vmem:[%s0 + $0x10] sm:$0xff]
  %v14 = vld [vmem:[%s0 + $0x18] sm:$0xff]
  %v15 = vld [vmem:[%s0 + $0x20] sm:$0xff]
  %v16 = vld [vmem:[%s0 + $0x28] sm:$0xff]
  %v17 = vld [vmem:[%s0 + $0x30] sm:$0xff]
  %v18 = vld [vmem:[%s0 + $0x38] sm:$0xff]
  %v19 = vld [vmem:[%s0 + $0x40] sm:$0xff]
  %v20 = vld [vmem:[%s0 + $0x48] sm:$0xff]
  %v21 = vld [vmem:[%s0 + $0x50] sm:$0xff]
  %v22 = vld [vmem:[%s0 + $0x58] sm:$0xff]
  %v23 = vld [vmem:[%s0 + $0x60] sm:$0xff]
  %v24 = vld [vmem:[%s0 + $0x68] sm:$0xff]
  %v25 = vld [vmem:[%s0 + $0x70] sm:$0xff]
  %v26 = vld [vmem:[%s0 + $0x78] sm:$0xff]
  %v27 = vld [vmem:[%s0 + $0x80] sm:$0xff]
  %v28 = vld [vmem:[%s0 + $0x88] sm:$0xff]
  %v29 = vld [vmem:[%s0 + $0x90] sm:$0xff]
  %v30 = vld [vmem:[%s0 + $0x98] sm:$0xff]
  %v31 = vld [vmem:[%s0 + $0xa0] sm:$0xff]
  %v32 = vld [vmem:[%s0 + $0xa8] sm:$0xff]
  %v33 = vld [vmem:[%s0 + $0xb0] sm:$0xff]
  %v34 = vld [vmem:[%s0 + $0xb8] sm:$0xff]
  %v35 = vld [vmem:[%s0 + $0xc0] sm:$0xff]
  %v36 = vld [vmem:[%s0 + $0xc8] sm:$0xff]
  %v37 = vld [vmem:[%s0 + $0xd0] sm:$0xff]
  %v38 = vld [vmem:[%s0 + $0xd8] sm:$0xff]
  %v39 = vld [vmem:[%s0 + $0xe0] sm:$0xff]
  %v40 = vld [vmem:[%s0 + $0xe8] sm:$0xff]
  %v41 = vld [vmem:[%s0 + $0xf0] sm:$0xff]
  %v42 = vld [vmem:[%s0 + $0xf8] sm:$0xff]
  %v43 = vld [vmem:[%s1] sm:$0xff]
  %v44 = vld [vmem:[%s1 + $0x8] sm:$0xff]
  %v45 = vld [vmem:[%s1 + $0x10] sm:$0xff]
  %v46 = vld [vmem:[%s1 + $0x18] sm:$0xff]
  %v47 = vld [vmem:[%s1 + $0x20] sm:$0xff]
  %v48 = vld [vmem:[%s1 + $0x28] sm:$0xff]
  %v49 = vld [vmem:[%s1 + $0x30] sm:$0xff]
  %v50 = vld [vmem:[%s1 + $0x38] sm:$0xff]
  %v51 = vld [vmem:[%s1 + $0x40] sm:$0xff]
  %v52 = vld [vmem:[%s1 + $0x48] sm:$0xff]
  %v53 = vld [vmem:[%s1 + $0x50] sm:$0xff]
  %v54 = vld [vmem:[%s1 + $0x58] sm:$0xff]
  %v55 = vld [vmem:[%s1 + $0x60] sm:$0xff]
  %v56 = vld [vmem:[%s1 + $0x68] sm:$0xff]
  %v57 = vld [vmem:[%s1 + $0x70] sm:$0xff]
  %v58 = vld [vmem:[%s1 + $0x78] sm:$0xff]
  %v59 = vld [vmem:[%s1 + $0x80] sm:$0xff]
  %v60 = vld [vmem:[%s1 + $0x88] sm:$0xff]
  %v61 = vld [vmem:[%s1 + $0x90] sm:$0xff]
  %v62 = vld [vmem:[%s1 + $0x98] sm:$0xff]
  %v63 = vld [vmem:[%s1 + $0xa0] sm:$0xff]
  %v64 = vld [vmem:[%s1 + $0xa8] sm:$0xff]
  %v65 = vld [vmem:[%s1 + $0xb0] sm:$0xff]
  %v66 = vld [vmem:[%s1 + $0xb8] sm:$0xff]
  %v67 = vld [vmem:[%s1 + $0xc0] sm:$0xff]
  %v68 = vld [vmem:[%s1 + $0xc8] sm:$0xff]
  %v69 = vld [vmem:[%s1 + $0xd0] sm:$0xff]
  %v70 = vld [vmem:[%s1 + $0xd8] sm:$0xff]
  %v71 = vld [vmem:[%s1 + $0xe0] sm:$0xff]
  %v72 = vld [vmem:[%s1 + $0xe8] sm:$0xff]
  %v73 = vld [vmem:[%s1 + $0xf0] sm:$0xff]
  %v74 = vld [vmem:[%s1 + $0xf8] sm:$0xff]
  %v75 = vld [vmem:[%s1 + $0x100] sm:$0xff]
  %v76 = vld [vmem:[%s1 + $0x108] sm:$0xff]
  %v77 = vld [vmem:[%s1 + $0x110] sm:$0xff]
  %v78 = vld [vmem:[%s1 + $0x118] sm:$0xff]
  %v79 = vld [vmem:[%s1 + $0x120] sm:$0xff]
  %v80 = vld [vmem:[%s1 + $0x128] sm:$0xff]
  %v81 = vld [vmem:[%s1 + $0x130] sm:$0xff]
  %v82 = vld [vmem:[%s1 + $0x138] sm:$0xff]
  %v83 = vld [vmem:[%s1 + $0x140] sm:$0xff]
  %v84 = vld [vmem:[%s1 + $0x148] sm:$0xff]
  %v85 = vld [vmem:[%s1 + $0x150] sm:$0xff]
  %v86 = vld [vmem:[%s1 + $0x158] sm:$0xff]
  %v87 = vld [vmem:[%s1 + $0x160] sm:$0xff]
  %v88 = vld [vmem:[%s1 + $0x168] sm:$0xff]
  %v89 = vld [vmem:[%s1 + $0x170] sm:$0xff]
  %v90 = vld [vmem:[%s1 + $0x178] sm:$0xff]
  %v91 = vld [vmem:[%s1 + $0x180] sm:$0xff]
  %v92 = vld [vmem:[%s1 + $0x188] sm:$0xff]
  %v93 = vld [vmem:[%s1 + $0x190] sm:$0xff]
  %v94 = vld [vmem:[%s1 + $0x198] sm:$0xff]
  %v95 = vld [vmem:[%s1 + $0x1a0] sm:$0xff]
  %v96 = vld [vmem:[%s1 + $0x1a8] sm:$0xff]
  %v97 = vld [vmem:[%s1 + $0x1b0] sm:$0xff]
  %v98 = vld [vmem:[%s1 + $0x1b8] sm:$0xff]
  %v99 = vld [vmem:[%s1 + $0x1c0] sm:$0xff]
  %v100 = vld [vmem:[%s1 + $0x1c8] sm:$0xff]
  %v101 = vld [vmem:[%s1 + $0x1d0] sm:$0xff]
  %v102 = vld [vmem:[%s1 + $0x1d8] sm:$0xff]
  %v103 = vld [vmem:[%s1 + $0x1e0] sm:$0xff]
  %v104 = vld [vmem:[%s1 + $0x1e8] sm:$0xff]
  %v105 = vld [vmem:[%s1 + $0x1f0] sm:$0xff]
  %v106 = vld [vmem:[%s1 + $0x1f8] sm:$0xff]
  %v107 = vld [vmem:[%s1 + $0x200] sm:$0xff]
  %v108 = vld [vmem:[%s1 + $0x208] sm:$0xff]
  %v109 = vld [vmem:[%s1 + $0x210] sm:$0xff]
  %v110 = vld [vmem:[%s1 + $0x218] sm:$0xff]
  %v111 = vld [vmem:[%s1 + $0x220] sm:$0xff]
  %v112 = vld [vmem:[%s1 + $0x228] sm:$0xff]
  %v113 = vld [vmem:[%s1 + $0x230] sm:$0xff]
  %v114 = vld [vmem:[%s1 + $0x238] sm:$0xff]
  %v115 = vld [vmem:[%s1 + $0x240] sm:$0xff]
  %v116 = vld [vmem:[%s1 + $0x248] sm:$0xff]
  %v117 = vld [vmem:[%s1 + $0x250] sm:$0xff]
  %v118 = vld [vmem:[%s1 + $0x258] sm:$0xff]
  %v119 = vld [vmem:[%s1 + $0x260] sm:$0xff]
  %v120 = vld [vmem:[%s1 + $0x268] sm:$0xff]
  %v121 = vld [vmem:[%s1 + $0x270] sm:$0xff]
  %v122 = vld [vmem:[%s1 + $0x278] sm:$0xff]
  %v123 = vld [vmem:[%s1 + $0x280] sm:$0xff]
  %v124 = vld [vmem:[%s1 + $0x288] sm:$0xff]
  %v125 = vld [vmem:[%s1 + $0x290] sm:$0xff]
  %v126 = vld [vmem:[%s1 + $0x298] sm:$0xff]
  %v127 = vld [vmem:[%s1 + $0x2a0] sm:$0xff]
  %v128 = vld [vmem:[%s1 + $0x2a8] sm:$0xff]
  %v129 = vld [vmem:[%s1 + $0x2b0] sm:$0xff]
  %v130 = vld [vmem:[%s1 + $0x2b8] sm:$0xff]
  %v131 = vld [vmem:[%s1 + $0x2c0] sm:$0xff]
  %v132 = vld [vmem:[%s1 + $0x2c8] sm:$0xff]
  %v133 = vld [vmem:[%s1 + $0x2d0] sm:$0xff]
  %v134 = vld [vmem:[%s1 + $0x2d8] sm:$0xff]
  %v135 = vld [vmem:[%s1 + $0x2e0] sm:$0xff]
  %v136 = vld [vmem:[%s1 + $0x2e8] sm:$0xff]
  %v137 = vld [vmem:[%s1 + $0x2f0] sm:$0xff]
  %v138 = vld [vmem:[%s1 + $0x2f8] sm:$0xff]
  %v139 = vld [vmem:[%s1 + $0x300] sm:$0xff]
  %v140 = vld [vmem:[%s1 + $0x308] sm:$0xff]
  %v141 = vld [vmem:[%s1 + $0x310] sm:$0xff]
  %v142 = vld [vmem:[%s1 + $0x318] sm:$0xff]
  %v143 = vld [vmem:[%s1 + $0x320] sm:$0xff]
  %v144 = vld [vmem:[%s1 + $0x328] sm:$0xff]
  %v145 = vld [vmem:[%s1 + $0x330] sm:$0xff]
  %v146 = vld [vmem:[%s1 + $0x338] sm:$0xff]
  %v147 = vld [vmem:[%s1 + $0x340] sm:$0xff]
  %v148 = vld [vmem:[%s1 + $0x348] sm:$0xff]
  %v149 = vld [vmem:[%s1 + $0x350] sm:$0xff]
  %v150 = vld [vmem:[%s1 + $0x358] sm:$0xff]
  %v151 = vld [vmem:[%s1 + $0x360] sm:$0xff]
  %v152 = vld [vmem:[%s1 + $0x368] sm:$0xff]
  %v153 = vld [vmem:[%s1 + $0x370] sm:$0xff]
  %v154 = vld [vmem:[%s1 + $0x378] sm:$0xff]
  %v155 = vld [vmem:[%s1 + $0x380] sm:$0xff]
  %v156 = vld [vmem:[%s1 + $0x388] sm:$0xff]
  %v157 = vld [vmem:[%s1 + $0x390] sm:$0xff]
  %v158 = vld [vmem:[%s1 + $0x398] sm:$0xff]
  %v159 = vld [vmem:[%s1 + $0x3a0] sm:$0xff]
  %v160 = vld [vmem:[%s1 + $0x3a8] sm:$0xff]
  %v161 = vld [vmem:[%s1 + $0x3b0] sm:$0xff]
  %v162 = vld [vmem:[%s1 + $0x3b8] sm:$0xff]
  %v163 = vld [vmem:[%s1 + $0x3c0] sm:$0xff]
  %v164 = vld [vmem:[%s1 + $0x3c8] sm:$0xff]
  %v165 = vld [vmem:[%s1 + $0x3d0] sm:$0xff]
  %v166 = vld [vmem:[%s1 + $0x3d8] sm:$0xff]
  %v167 = vld [vmem:[%s1 + $0x3e0] sm:$0xff]
  %v168 = vld [vmem:[%s1 + $0x3e8] sm:$0xff]
  %v169 = vld [vmem:[%s1 + $0x3f0] sm:$0xff]
  %v170 = vld [vmem:[%s1 + $0x3f8] sm:$0xff]
  %171 = vmatprep.subr.mxu0 0.0
  %172 = vmatpush1.msra.mxu0 %v43
  %173 = vmatprep.subr.mxu0 0.0
  %174 = vmatpush1.msra.mxu0 %v44
  %175 = vmatprep.subr.mxu0 0.0
  %176 = vmatpush1.msra.mxu0 %v45
  %177 = vmatprep.subr.mxu0 0.0
  %178 = vmatpush1.msra.mxu0 %v46
  %179 = vmatprep.subr.mxu0 0.0
  %180 = vmatpush1.msra.mxu0 %v47
  %181 = vmatprep.subr.mxu0 0.0
  %182 = vmatpush1.msra.mxu0 %v48
  %183 = vmatprep.subr.mxu0 0.0
  %184 = vmatpush1.msra.mxu0 %v49
  %185 = vmatprep.subr.mxu0 0.0
  %186 = vmatpush1.msra.mxu0 %v50
  %187 = vmatprep.subr.mxu0 0.0
  %188 = vmatpush1.msra.mxu0 %v51
  %189 = vmatprep.subr.mxu0 0.0
  %190 = vmatpush1.msra.mxu0 %v52
  %191 = vmatprep.subr.mxu0 0.0
  %192 = vmatpush1.msra.mxu0 %v53
  %193 = vmatprep.subr.mxu0 0.0
  %194 = vmatpush1.msra.mxu0 %v54
  %195 = vmatprep.subr.mxu0 0.0
  %196 = vmatpush1.msra.mxu0 %v55
  %197 = vmatprep.subr.mxu0 0.0
  %198 = vmatpush1.msra.mxu0 %v56
  %199 = vmatprep.subr.mxu0 0.0
  %200 = vmatpush1.msra.mxu0 %v57
  %201 = vmatprep.subr.mxu0 0.0
  %202 = vmatpush1.msra.mxu0 %v58
  %203 = vmatprep.subr.mxu0 0.0
  %204 = vmatpush1.msra.mxu0 %v59
  %205 = vmatprep.subr.mxu0 0.0
  %206 = vmatpush1.msra.mxu0 %v60
  %207 = vmatprep.subr.mxu0 0.0
  %208 = vmatpush1.msra.mxu0 %v61
  %209 = vmatprep.subr.mxu0 0.0
  %210 = vmatpush1.msra.mxu0 %v62
  %211 = vmatprep.subr.mxu0 0.0
  %212 = vmatpush1.msra.mxu0 %v63
  %213 = vmatprep.subr.mxu0 0.0
  %214 = vmatpush1.msra.mxu0 %v64
  %215 = vmatprep.subr.mxu0 0.0
  %216 = vmatpush1.msra.mxu0 %v65
  %217 = vmatprep.subr.mxu0 0.0
  %218 = vmatpush1.msra.mxu0 %v66
  %219 = vmatprep.subr.mxu0 0.0
  %220 = vmatpush1.msra.mxu0 %v67
  %221 = vmatprep.subr.mxu0 0.0
  %222 = vmatpush1.msra.mxu0 %v68
  %223 = vmatprep.subr.mxu0 0.0
  %224 = vmatpush1.msra.mxu0 %v69
  %225 = vmatprep.subr.mxu0 0.0
  %226 = vmatpush1.msra.mxu0 %v70
  %227 = vmatprep.subr.mxu0 0.0
  %228 = vmatpush1.msra.mxu0 %v71
  %229 = vmatprep.subr.mxu0 0.0
  %230 = vmatpush1.msra.mxu0 %v72
  %231 = vmatprep.subr.mxu0 0.0
  %232 = vmatpush1.msra.mxu0 %v73
  %233 = vmatprep.subr.mxu0 0.0
  %234 = vmatpush1.msra.mxu0 %v74
  %235 = vmatprep.mubr.f32.mxu0 %v12
  %236 = vmatmul.mubr.f32.gmra.mrb[0].mxu0 %v11
  %v237 = vpop.f32.mrb[0].mxu0
  %v238 = vadd.f32 0.0, %v237
  %v239 = vpop.f32.mrb[0].mxu0
  %240 = vmatprep.mubr.f32.mxu0 %v20
  %241 = vmatmul.mubr.f32.gmra.mrb[0].mxu0 %v19
  %v242 = vpop.f32.mrb[0].mxu0
  %v243 = vadd.f32 0.0, %v242
  %v244 = vpop.f32.mrb[0].mxu0
  %245 = vmatprep.mubr.f32.mxu0 %v28
  %246 = vmatmul.mubr.f32.gmra.mrb[0].mxu0 %v27
  %v247 = vpop.f32.mrb[0].mxu0
  %v248 = vadd.f32 0.0, %v247
  %v249 = vpop.f32.mrb[0].mxu0
  %250 = vmatprep.mubr.f32.mxu0 %v36
  %251 = vmatmul.mubr.f32.gmra.mrb[0].mxu0 %v35
  %v252 = vpop.f32.mrb[0].mxu0
  %v253 = vadd.f32 0.0, %v252
  %v254 = vpop.f32.mrb[0].mxu0
  %255 = vdwg.mxu0
  %256 = vmatprep.subr.mxu0 0.0
  %257 = vmatpush1.msra.mxu0 %v75
  %258 = vmatprep.subr.mxu0 0.0
  %259 = vmatpush1.msra.mxu0 %v76
  %260 = vmatprep.subr.mxu0 0.0
  %261 = vmatpush1.msra.mxu0 %v77
  %262 = vmatprep.subr.mxu0 0.0
  %263 = vmatpush1.msra.mxu0 %v78
  %264 = vmatprep.subr.mxu0 0.0
  %265 = vmatpush1.msra.mxu0 %v79
  %266 = vmatprep.subr.mxu0 0.0
  %267 = vmatpush1.msra.mxu0 %v80
  %268 = vmatprep.subr.mxu0 0.0
  %269 = vmatpush1.msra.mxu0 %v81
  %270 = vmatprep.subr.mxu0 0.0
  %271 = vmatpush1.msra.mxu0 %v82
  %272 = vmatprep.subr.mxu0 0.0
  %273 = vmatpush1.msra.mxu0 %v83
  %274 = vmatprep.subr.mxu0 0.0
  %275 = vmatpush1.msra.mxu0 %v84
  %276 = vmatprep.subr.mxu0 0.0
  %277 = vmatpush1.msra.mxu0 %v85
  %278 = vmatprep.subr.mxu0 0.0
  %279 = vmatpush1.msra.mxu0 %v86
  %280 = vmatprep.subr.mxu0 0.0
  %281 = vmatpush1.msra.mxu0 %v87
  %282 = vmatprep.subr.mxu0 0.0
  %283 = vmatpush1.msra.mxu0 %v88
  %284 = vmatprep.subr.mxu0 0.0
  %285 = vmatpush1.msra.mxu0 %v89
  %286 = vmatprep.subr.mxu0 0.0
  %287 = vmatpush1.msra.mxu0 %v90
  %288 = vmatprep.subr.mxu0 0.0
  %289 = vmatpush1.msra.mxu0 %v91
  %290 = vmatprep.subr.mxu0 0.0
  %291 = vmatpush1.msra.mxu0 %v92
  %292 = vmatprep.subr.mxu0 0.0
  %293 = vmatpush1.msra.mxu0 %v93
  %294 = vmatprep.subr.mxu0 0.0
  %295 = vmatpush1.msra.mxu0 %v94
  %296 = vmatprep.subr.mxu0 0.0
  %297 = vmatpush1.msra.mxu0 %v95
  %298 = vmatprep.subr.mxu0 0.0
  %299 = vmatpush1.msra.mxu0 %v96
  %300 = vmatprep.subr.mxu0 0.0
  %301 = vmatpush1.msra.mxu0 %v97
  %302 = vmatprep.subr.mxu0 0.0
  %303 = vmatpush1.msra.mxu0 %v98
  %304 = vmatprep.subr.mxu0 0.0
  %305 = vmatpush1.msra.mxu0 %v99
  %306 = vmatprep.subr.mxu0 0.0
  %307 = vmatpush1.msra.mxu0 %v100
  %308 = vmatprep.subr.mxu0 0.0
  %309 = vmatpush1.msra.mxu0 %v101
  %310 = vmatprep.subr.mxu0 0.0
  %311 = vmatpush1.msra.mxu0 %v102
  %312 = vmatprep.subr.mxu0 0.0
  %313 = vmatpush1.msra.mxu0 %v103
  %314 = vmatprep.subr.mxu0 0.0
  %315 = vmatpush1.msra.mxu0 %v104
  %316 = vmatprep.subr.mxu0 0.0
  %317 = vmatpush1.msra.mxu0 %v105
  %318 = vmatprep.subr.mxu0 0.0
  %319 = vmatpush1.msra.mxu0 %v106
  %320 = vmatprep.mubr.f32.mxu0 %v14
  %321 = vmatmul.mubr.f32.gmra.mrb[0].mxu0 %v13
  %v322 = vpop.f32.mrb[0].mxu0
  %v323 = vadd.f32 %v238, %v322
  %v324 = vpop.f32.mrb[0].mxu0
  %325 = vmatprep.mubr.f32.mxu0 %v22
  %326 = vmatmul.mubr.f32.gmra.mrb[0].mxu0 %v21
  %v327 = vpop.f32.mrb[0].mxu0
  %v328 = vadd.f32 %v243, %v327
  %v329 = vpop.f32.mrb[0].mxu0
  %330 = vmatprep.mubr.f32.mxu0 %v30
  %331 = vmatmul.mubr.f32.gmra.mrb[0].mxu0 %v29
  %v332 = vpop.f32.mrb[0].mxu0
  %v333 = vadd.f32 %v248, %v332
  %v334 = vpop.f32.mrb[0].mxu0
  %335 = vmatprep.mubr.f32.mxu0 %v38
  %336 = vmatmul.mubr.f32.gmra.mrb[0].mxu0 %v37
  %v337 = vpop.f32.mrb[0].mxu0
  %v338 = vadd.f32 %v253, %v337
  %v339 = vpop.f32.mrb[0].mxu0
  %340 = vdwg.mxu0
  %341 = vmatprep.subr.mxu0 0.0
  %342 = vmatpush1.msra.mxu0 %v107
  %343 = vmatprep.subr.mxu0 0.0
  %344 = vmatpush1.msra.mxu0 %v108
  %345 = vmatprep.subr.mxu0 0.0
  %346 = vmatpush1.msra.mxu0 %v109
  %347 = vmatprep.subr.mxu0 0.0
  %348 = vmatpush1.msra.mxu0 %v110
  %349 = vmatprep.subr.mxu0 0.0
  %350 = vmatpush1.msra.mxu0 %v111
  %351 = vmatprep.subr.mxu0 0.0
  %352 = vmatpush1.msra.mxu0 %v112
  %353 = vmatprep.subr.mxu0 0.0
  %354 = vmatpush1.msra.mxu0 %v113
  %355 = vmatprep.subr.mxu0 0.0
  %356 = vmatpush1.msra.mxu0 %v114
  %357 = vmatprep.subr.mxu0 0.0
  %358 = vmatpush1.msra.mxu0 %v115
  %359 = vmatprep.subr.mxu0 0.0
  %360 = vmatpush1.msra.mxu0 %v116
  %361 = vmatprep.subr.mxu0 0.0
  %362 = vmatpush1.msra.mxu0 %v117
  %363 = vmatprep.subr.mxu0 0.0
  %364 = vmatpush1.msra.mxu0 %v118
  %365 = vmatprep.subr.mxu0 0.0
  %366 = vmatpush1.msra.mxu0 %v119
  %367 = vmatprep.subr.mxu0 0.0
  %368 = vmatpush1.msra.mxu0 %v120
  %369 = vmatprep.subr.mxu0 0.0
  %370 = vmatpush1.msra.mxu0 %v121
  %371 = vmatprep.subr.mxu0 0.0
  %372 = vmatpush1.msra.mxu0 %v122
  %373 = vmatprep.subr.mxu0 0.0
  %374 = vmatpush1.msra.mxu0 %v123
  %375 = vmatprep.subr.mxu0 0.0
  %376 = vmatpush1.msra.mxu0 %v124
  %377 = vmatprep.subr.mxu0 0.0
  %378 = vmatpush1.msra.mxu0 %v125
  %379 = vmatprep.subr.mxu0 0.0
  %380 = vmatpush1.msra.mxu0 %v126
  %381 = vmatprep.subr.mxu0 0.0
  %382 = vmatpush1.msra.mxu0 %v127
  %383 = vmatprep.subr.mxu0 0.0
  %384 = vmatpush1.msra.mxu0 %v128
  %385 = vmatprep.subr.mxu0 0.0
  %386 = vmatpush1.msra.mxu0 %v129
  %387 = vmatprep.subr.mxu0 0.0
  %388 = vmatpush1.msra.mxu0 %v130
  %389 = vmatprep.subr.mxu0 0.0
  %390 = vmatpush1.msra.mxu0 %v131
  %391 = vmatprep.subr.mxu0 0.0
  %392 = vmatpush1.msra.mxu0 %v132
  %393 = vmatprep.subr.mxu0 0.0
  %394 = vmatpush1.msra.mxu0 %v133
  %395 = vmatprep.subr.mxu0 0.0
  %396 = vmatpush1.msra.mxu0 %v134
  %397 = vmatprep.subr.mxu0 0.0
  %398 = vmatpush1.msra.mxu0 %v135
  %399 = vmatprep.subr.mxu0 0.0
  %400 = vmatpush1.msra.mxu0 %v136
  %401 = vmatprep.subr.mxu0 0.0
  %402 = vmatpush1.msra.mxu0 %v137
  %403 = vmatprep.subr.mxu0 0.0
  %404 = vmatpush1.msra.mxu0 %v138
  %405 = vmatprep.mubr.f32.mxu0 %v16
  %406 = vmatmul.mubr.f32.gmra.mrb[0].mxu0 %v15
  %v407 = vpop.f32.mrb[0].mxu0
  %v408 = vadd.f32 %v323, %v407
  %v409 = vpop.f32.mrb[0].mxu0
  %410 = vmatprep.mubr.f32.mxu0 %v24
  %411 = vmatmul.mubr.f32.gmra.mrb[0].mxu0 %v23
  %v412 = vpop.f32.mrb[0].mxu0
  %v413 = vadd.f32 %v328, %v412
  %v414 = vpop.f32.mrb[0].mxu0
  %415 = vmatprep.mubr.f32.mxu0 %v32
  %416 = vmatmul.mubr.f32.gmra.mrb[0].mxu0 %v31
  %v417 = vpop.f32.mrb[0].mxu0
  %v418 = vadd.f32 %v333, %v417
  %v419 = vpop.f32.mrb[0].mxu0
  %420 = vmatprep.mubr.f32.mxu0 %v40
  %421 = vmatmul.mubr.f32.gmra.mrb[0].mxu0 %v39
  %v422 = vpop.f32.mrb[0].mxu0
  %v423 = vadd.f32 %v338, %v422
  %v424 = vpop.f32.mrb[0].mxu0
  %425 = vdwg.mxu0
  %426 = vmatprep.subr.mxu0 0.0
  %427 = vmatpush1.msra.mxu0 %v139
  %428 = vmatprep.subr.mxu0 0.0
  %429 = vmatpush1.msra.mxu0 %v140
  %430 = vmatprep.subr.mxu0 0.0
  %431 = vmatpush1.msra.mxu0 %v141
  %432 = vmatprep.subr.mxu0 0.0
  %433 = vmatpush1.msra.mxu0 %v142
  %434 = vmatprep.subr.mxu0 0.0
  %435 = vmatpush1.msra.mxu0 %v143
  %436 = vmatprep.subr.mxu0 0.0
  %437 = vmatpush1.msra.mxu0 %v144
  %438 = vmatprep.subr.mxu0 0.0
  %439 = vmatpush1.msra.mxu0 %v145
  %440 = vmatprep.subr.mxu0 0.0
  %441 = vmatpush1.msra.mxu0 %v146
  %442 = vmatprep.subr.mxu0 0.0
  %443 = vmatpush1.msra.mxu0 %v147
  %444 = vmatprep.subr.mxu0 0.0
  %445 = vmatpush1.msra.mxu0 %v148
  %446 = vmatprep.subr.mxu0 0.0
  %447 = vmatpush1.msra.mxu0 %v149
  %448 = vmatprep.subr.mxu0 0.0
  %449 = vmatpush1.msra.mxu0 %v150
  %450 = vmatprep.subr.mxu0 0.0
  %451 = vmatpush1.msra.mxu0 %v151
  %452 = vmatprep.subr.mxu0 0.0
  %453 = vmatpush1.msra.mxu0 %v152
  %454 = vmatprep.subr.mxu0 0.0
  %455 = vmatpush1.msra.mxu0 %v153
  %456 = vmatprep.subr.mxu0 0.0
  %457 = vmatpush1.msra.mxu0 %v154
  %458 = vmatprep.subr.mxu0 0.0
  %459 = vmatpush1.msra.mxu0 %v155
  %460 = vmatprep.subr.mxu0 0.0
  %461 = vmatpush1.msra.mxu0 %v156
  %462 = vmatprep.subr.mxu0 0.0
  %463 = vmatpush1.msra.mxu0 %v157
  %464 = vmatprep.subr.mxu0 0.0
  %465 = vmatpush1.msra.mxu0 %v158
  %466 = vmatprep.subr.mxu0 0.0
  %467 = vmatpush1.msra.mxu0 %v159
  %468 = vmatprep.subr.mxu0 0.0
  %469 = vmatpush1.msra.mxu0 %v160
  %470 = vmatprep.subr.mxu0 0.0
  %471 = vmatpush1.msra.mxu0 %v161
  %472 = vmatprep.subr.mxu0 0.0
  %473 = vmatpush1.msra.mxu0 %v162
  %474 = vmatprep.subr.mxu0 0.0
  %475 = vmatpush1.msra.mxu0 %v163
  %476 = vmatprep.subr.mxu0 0.0
  %477 = vmatpush1.msra.mxu0 %v164
  %478 = vmatprep.subr.mxu0 0.0
  %479 = vmatpush1.msra.mxu0 %v165
  %480 = vmatprep.subr.mxu0 0.0
  %481 = vmatpush1.msra.mxu0 %v166
  %482 = vmatprep.subr.mxu0 0.0
  %483 = vmatpush1.msra.mxu0 %v167
  %484 = vmatprep.subr.mxu0 0.0
  %485 = vmatpush1.msra.mxu0 %v168
  %486 = vmatprep.subr.mxu0 0.0
  %487 = vmatpush1.msra.mxu0 %v169
  %488 = vmatprep.subr.mxu0 0.0
  %489 = vmatpush1.msra.mxu0 %v170
  %490 = vmatprep.mubr.f32.mxu0 %v18
  %491 = vmatmul.mubr.f32.gmra.mrb[0].mxu0 %v17
  %v492 = vpop.f32.mrb[0].mxu0
  %v493 = vadd.f32 %v408, %v492
  %v494 = vpop.f32.mrb[0].mxu0
  %495 = vmatprep.mubr.f32.mxu0 %v26
  %496 = vmatmul.mubr.f32.gmra.mrb[0].mxu0 %v25
  %v497 = vpop.f32.mrb[0].mxu0
  %v498 = vadd.f32 %v413, %v497
  %v499 = vpop.f32.mrb[0].mxu0
  %500 = vmatprep.mubr.f32.mxu0 %v34
  %501 = vmatmul.mubr.f32.gmra.mrb[0].mxu0 %v33
  %v502 = vpop.f32.mrb[0].mxu0
  %v503 = vadd.f32 %v418, %v502
  %v504 = vpop.f32.mrb[0].mxu0
  %505 = vmatprep.mubr.f32.mxu0 %v42
  %506 = vmatmul.mubr.f32.gmra.mrb[0].mxu0 %v41
  %v507 = vpop.f32.mrb[0].mxu0
  %v508 = vadd.f32 %v423, %v507
  %v509 = vpop.f32.mrb[0].mxu0
  %510 = vdwg.mxu0
  %vm511 = vcmask 31744
  %512 = vst.msk [vmem:[%s2] sm:$0xff] %vm511, %v493
  %513 = vst.msk [vmem:[%s2 + $0x8] sm:$0xff] %vm511, %v498
  %514 = vst.msk [vmem:[%s2 + $0x10] sm:$0xff] %vm511, %v503
  %515 = vst.msk [vmem:[%s2 + $0x18] sm:$0xff] %vm511, %v508
  // Predicated region
  $region10: #{tpu_custom_call.1} parent=0 // pred_check
    _
  $region11: #{tpu_custom_call.1} parent=0 // pred_check_branch
    %517 = sbr.rel (0) target = $region13
  $region12: #{tpu_custom_call.1} parent=0 // pred_region
    _
  $region13: #{tpu_custom_call.1} parent=0 // pred_fallthru
    _
  // Predicated region
  $region14: #{tpu_custom_call.1} parent=0 // pred_check
    _
  $region15: #{tpu_custom_call.1} parent=0 // pred_check_branch
    %519 = sbr.rel (0) target = $region17
  $region16: #{tpu_custom_call.1} parent=0 // pred_region
    _
  $region17: #{tpu_custom_call.1} parent=0 // pred_fallthru
    _

</llo_original>
